<compile_context>
chip_gen: v7x
topology: tpu7x:2x2x1
jax: 0.10.0
libtpu: 0.0.40
codegen_flags: <defaults>
</compile_context>

<pallas_src>
import math
import functools

import jax
import jax.numpy as jnp
from jax.experimental import pallas as pl
from jax.experimental.pallas import tpu as pltpu

_HALF_PI = 0.5 * math.pi


# -----------------------------------------------------------------------------
# VMEM budgeting (generation aware)
# -----------------------------------------------------------------------------
def _vmem_budget():
    try:
        cap = int(pltpu.get_tpu_info().vmem_capacity_bytes)
    except Exception:
        cap = None
    if cap is None:
        return 48 * 1024 * 1024               # safe on every generation
    # ~96 MiB on 128 MiB parts (v5e/v6e), ~48 MiB on 64 MiB parts (v7x per-TC)
    return min(cap * 3 // 4, 100 * 1024 * 1024)


def _divisor_tiles(V):
    return [c for c in range(V, 0, -1) if V % c == 0 and (c == V or c % 8 == 0)]


def _pick_chunk(V, H, budget):
    for c in _divisor_tiles(V):
        if 8 * c * V * H * 4 <= budget // 3:
            return c
    return _divisor_tiles(V)[-1]


def _fused_footprint(V, H, C, chunk):
    fixed = (V * V * H * 2                      # e_s bf16 (resident)
             + 3 * V * H * 4                    # x_s + u_s + b_s
             + 2 * V * V * 4                    # graph input block (double buffered)
             + 2 * V * H * 4                    # x input block
             + 2 * C * V * V * 4                # output block
             + 2 * 16 * H * H)                  # weights (layer + embed + head)
    temps = 8 * chunk * V * H * 4               # per-chunk f32 temporaries
    return fixed + temps


def _fused_fits(V, H, C, budget):
    chunk = _pick_chunk(V, H, budget)
    return _fused_footprint(V, H, C, chunk) <= budget, chunk


def _pick_edge_tile(V, H, budget):
    fixed = 16 * V * H + 40 * H * H
    for tv in _divisor_tiles(V):
        if fixed + tv * V * H * 32 <= budget:
            return tv
    return _divisor_tiles(V)[-1]


def _pick_head_tile(V, H, C, budget):
    for tv in _divisor_tiles(V):
        if tv * V * H * 14 + 8 * C * tv * V + 8 * H * H <= budget:
            return tv
    return _divisor_tiles(V)[-1]


# -----------------------------------------------------------------------------
# shared in-kernel math
# -----------------------------------------------------------------------------
def _layernorm(z, gamma, beta, eps=1e-5):
    mu = jnp.mean(z, axis=-1, keepdims=True)
    var = jnp.mean((z - mu) ** 2, axis=-1, keepdims=True)
    return (z - mu) * jax.lax.rsqrt(var + eps) * gamma + beta


# -----------------------------------------------------------------------------
# Kernel 1: plain linear  y = x @ W + b   (node_embed path; tiny)
# -----------------------------------------------------------------------------
def _linear_kernel(x_ref, w_ref, b_ref, o_ref):
    o_ref[...] = (
        jnp.dot(x_ref[...], w_ref[...], preferred_element_type=jnp.float32)
        + b_ref[...]
    )


def pallas_linear(x, w, b):
    n, d_in = x.shape
    d_out = w.shape[1]
    return pl.pallas_call(
        _linear_kernel,
        out_shape=jax.ShapeDtypeStruct((n, d_out), jnp.float32),
        grid=(1,),
        in_specs=[
            pl.BlockSpec((n, d_in), lambda i: (0, 0)),
            pl.BlockSpec((d_in, d_out), lambda i: (0, 0)),
            pl.BlockSpec((1, d_out), lambda i: (0, 0)),
        ],
        out_specs=pl.BlockSpec((n, d_out), lambda i: (0, 0)),
        compiler_params=pltpu.CompilerParams(dimension_semantics=("parallel",)),
    )(x, w, b)


# -----------------------------------------------------------------------------
# Kernel 2 (MAIN, fused path): embed + L GNN layers + output head, grid=(B, L).
# The edge tensor lives only in VMEM scratch (e_s); it never touches HBM.
# -----------------------------------------------------------------------------
def _fused_encoder_kernel(graph_ref, x_ref, inv_ref, we_ref, be_ref,
                          wn_ref, bn_ref, wc_ref, bc_ref, wo_ref, bo_ref, ln_ref,
                          gg_ref, gb_ref, ow_ref, ob_ref,
                          o_ref, x_s, u_s, b_s, e_s, *, groups, chunk):
    l = pl.program_id(1)
    L = pl.num_programs(1)
    V, H = x_s.shape
    nch = V // chunk

    # ---- l == 0: node features + fused ScalarEmbeddingSine3D + edge_embed -------
    @pl.when(l == 0)
    def _():
        x_s[...] = x_ref[0]
        inv = inv_ref[...]                               # (1, H)
        we = we_ref[...]                                 # (H, H) bf16
        be = be_ref[...]                                 # (1, H)

        def embed_chunk(c, carry):
            r0 = pl.multiple_of(c * chunk, chunk)
            g = graph_ref[0, pl.ds(r0, chunk), :]        # (chunk, V) f32
            arg = g.reshape(chunk * V, 1) * inv          # (chunk*V, H)
            lane = jax.lax.broadcasted_iota(jnp.int32, arg.shape, 1)
            # even lanes -> sin(arg), odd lanes -> cos(arg) via single sin
            emb = jnp.sin(arg + (lane % 2).astype(jnp.float32) * _HALF_PI)
            y = jnp.dot(emb.astype(jnp.bfloat16), we,
                        preferred_element_type=jnp.float32) + be
            e_s[pl.ds(r0, chunk)] = y.reshape(chunk, V, H).astype(jnp.bfloat16)
            return carry

        jax.lax.fori_loop(0, nch, embed_chunk, 0)

    # ---- gated graph-conv layer (mode='direct') + encoder-level residuals -------
    h = x_s[...]                                          # (V, H) f32 (pre-update)
    wn = wn_ref[0]                                        # (H, 4H) bf16  [V|A|U|B]
    bn = bn_ref[0]                                        # (1, 4H)
    uvab = jnp.dot(h.astype(jnp.bfloat16), wn,
                   preferred_element_type=jnp.float32) + bn
    Vh = uvab[:, 0:H]
    Ah = uvab[:, H:2 * H]
    u_s[...] = uvab[:, 2 * H:3 * H]                       # Uh rows
    b_s[...] = uvab[:, 3 * H:4 * H]                       # Bh rows

    wc = wc_ref[0]
    bc = bc_ref[0]
    wo = wo_ref[0]
    bo = bo_ref[0]
    ln = ln_ref[0]                                        # (6, 1, H)

    def layer_chunk(c, carry):
        r0 = pl.multiple_of(c * chunk, chunk)
        e_rows = e_s[pl.ds(r0, chunk)]                    # (chunk, V, H) bf16
        Ce = (jnp.dot(e_rows.reshape(chunk * V, H), wc,
                      preferred_element_type=jnp.float32) + bc
              ).reshape(chunk, V, H)
        Uh_r = u_s[pl.ds(r0, chunk), :]
        Bh_r = b_s[pl.ds(r0, chunk), :]
        # e_new[i, j] = Ah[j] + Bh[i] + Ce[i, j]
        e_new = Ah[None, :, :] + Bh_r[:, None, :] + Ce
        gates = jax.nn.sigmoid(e_new)                     # f32 EUP (v5e-safe)
        agg = jnp.sum(gates * Vh[None, :, :], axis=1)     # 'sum' aggregation over j
        h_new = jnp.maximum(_layernorm(Uh_r + agg, ln[0], ln[1]), 0.0)
        x_s[pl.ds(r0, chunk), :] = x_s[pl.ds(r0, chunk), :] + h_new   # x = x_in + x
        e2 = jnp.maximum(_layernorm(e_new.reshape(chunk * V, H), ln[2], ln[3]), 0.0)
        t = _layernorm(e2, ln[4], ln[5])
        t = t * jax.nn.sigmoid(t)                         # SiLU
        t = jnp.dot(t.astype(jnp.bfloat16), wo,           # zero_module Linear
                    preferred_element_type=jnp.float32) + bo
        e_out = e_rows.reshape(chunk * V, H).astype(jnp.float32) + t  # e = e_in + out
        e_s[pl.ds(r0, chunk)] = e_out.reshape(chunk, V, H).astype(jnp.bfloat16)
        return carry

    jax.lax.fori_loop(0, nch, layer_chunk, 0)

    # ---- l == L-1: fused GroupNorm32 + ReLU + 1x1 conv head ----------------------
    @pl.when(l == L - 1)
    def _():
        gs = H // groups
        n_per_group = float(V * V * gs)
        gamma = gg_ref[...]
        beta = gb_ref[...]
        ow = ow_ref[...]                                  # (C, H) bf16
        ob = ob_ref[...]                                  # (C, 1)

        def stat_chunk(c, carry):
            s, ss = carry
            r0 = pl.multiple_of(c * chunk, chunk)
            xr = e_s[pl.ds(r0, chunk)].reshape(chunk * V, H).astype(jnp.float32)
            return (s + jnp.sum(xr, axis=0, keepdims=True),
                    ss + jnp.sum(xr * xr, axis=0, keepdims=True))

        zero = jnp.zeros((1, H), jnp.float32)
        s, ss = jax.lax.fori_loop(0, nch, stat_chunk, (zero, zero))

        # same-group channel mask built in-kernel (no HBM parameter)
        ci = jax.lax.broadcasted_iota(jnp.int32, (H, H), 0) // gs
        cj = jax.lax.broadcasted_iota(jnp.int32, (H, H), 1) // gs
        gmask = (ci == cj).astype(jnp.float32)
        mean = jnp.dot(s, gmask, preferred_element_type=jnp.float32) / n_per_group
        ex2 = jnp.dot(ss, gmask, preferred_element_type=jnp.float32) / n_per_group
        var = jnp.maximum(ex2 - mean * mean, 0.0)
        scale = gamma * jax.lax.rsqrt(var + 1e-5)
        shift = beta - mean * scale

        def head_chunk(c, carry):
            r0 = pl.multiple_of(c * chunk, chunk)
            xr = e_s[pl.ds(r0, chunk)].reshape(chunk * V, H).astype(jnp.float32)
            xn = jnp.maximum(xr * scale + shift, 0.0)
            y = jax.lax.dot_general(                      # (C, chunk*V) lane-dense
                ow, xn.astype(jnp.bfloat16),
                dimension_numbers=(((1,), (1,)), ((), ())),
                preferred_element_type=jnp.float32)
            o_ref[0, c] = y + ob
            return carry

        jax.lax.fori_loop(0, nch, head_chunk, 0)


def gnn_encoder_fused_pallas(x, graph, params, *, chunk, vmem_limit):
    B, V, H = x.shape
    stacks = params["layers"]
    L = int(stacks["wn"].shape[0])
    C = int(params["out_w_t"].shape[0])
    nch = V // chunk
    kernel = functools.partial(_fused_encoder_kernel,
                               groups=params["groups"], chunk=chunk)
    out = pl.pallas_call(
        kernel,
        out_shape=jax.ShapeDtypeStruct((B, nch, C, chunk * V), jnp.float32),
        grid=(B, L),
        in_specs=[
            pl.BlockSpec((1, V, V), lambda b, l: (b, 0, 0)),        # graph
            pl.BlockSpec((1, V, H), lambda b, l: (b, 0, 0)),        # x (node feats)
            pl.BlockSpec((1, H), lambda b, l: (0, 0)),              # inv_dim_t
            pl.BlockSpec((H, H), lambda b, l: (0, 0)),              # edge_embed_w
            pl.BlockSpec((1, H), lambda b, l: (0, 0)),              # edge_embed_b
            pl.BlockSpec((1, H, 4 * H), lambda b, l: (l, 0, 0)),    # wn
            pl.BlockSpec((1, 1, 4 * H), lambda b, l: (l, 0, 0)),    # bn
            pl.BlockSpec((1, H, H), lambda b, l: (l, 0, 0)),        # wc
            pl.BlockSpec((1, 1, H), lambda b, l: (l, 0, 0)),        # bc
            pl.BlockSpec((1, H, H), lambda b, l: (l, 0, 0)),        # wo
            pl.BlockSpec((1, 1, H), lambda b, l: (l, 0, 0)),        # bo
            pl.BlockSpec((1, 6, 1, H), lambda b, l: (l, 0, 0, 0)),  # ln
            pl.BlockSpec((1, H), lambda b, l: (0, 0)),              # gn_gamma
            pl.BlockSpec((1, H), lambda b, l: (0, 0)),              # gn_beta
            pl.BlockSpec((C, H), lambda b, l: (0, 0)),              # out conv w
            pl.BlockSpec((C, 1), lambda b, l: (0, 0)),              # out conv b
        ],
        out_specs=pl.BlockSpec((1, nch, C, chunk * V), lambda b, l: (b, 0, 0, 0)),
        scratch_shapes=[
            pltpu.VMEM((V, H), jnp.float32),       # x_s (node residual stream)
            pltpu.VMEM((V, H), jnp.float32),       # u_s (Uh rows)
            pltpu.VMEM((V, H), jnp.float32),       # b_s (Bh rows)
            pltpu.VMEM((V, V, H), jnp.bfloat16),   # e_s (edge tensor, VMEM-resident)
        ],
        compiler_params=pltpu.CompilerParams(
            dimension_semantics=("parallel", "arbitrary"),
            vmem_limit_bytes=int(vmem_limit)),
    )(graph.astype(jnp.float32), x, params["inv_dim_t"],
      params["edge_embed_w"], params["edge_embed_b"],
      stacks["wn"], stacks["bn"], stacks["wc"], stacks["bc"],
      stacks["wo"], stacks["bo"], stacks["ln"],
      params["gn_gamma"], params["gn_beta"], params["out_w_t"], params["out_b"])
    return (out.reshape(B, nch, C, chunk, V)
               .transpose(0, 2, 1, 3, 4)
               .reshape(B, C, V, V))


# -----------------------------------------------------------------------------
# Fallback path kernel A: fused ScalarEmbeddingSine3D + edge_embed (bf16 out)
# -----------------------------------------------------------------------------
def _edge_embed_kernel(g_ref, inv_ref, w_ref, b_ref, o_ref):
    arg = g_ref[...] * inv_ref[...]                       # (rb, 1) * (1, H)
    lane = jax.lax.broadcasted_iota(jnp.int32, arg.shape, 1)
    emb = jnp.sin(arg + (lane % 2).astype(jnp.float32) * _HALF_PI)
    y = jnp.dot(emb.astype(jnp.bfloat16), w_ref[...],
                preferred_element_type=jnp.float32) + b_ref[...]
    o_ref[...] = y.astype(jnp.bfloat16)


def _pick_row_block(n, target):
    if n <= target:
        return n
    for rb in range(min(target, n), 0, -1):
        if n % rb == 0 and rb % 16 == 0:
            return rb
    return n


def edge_embed_pallas(graph, inv_dim_t, w_bf16, b, *, vmem_limit, row_target=4096):
    B, V, _ = graph.shape
    H = w_bf16.shape[0]
    n = B * V * V
    g = graph.reshape(n, 1).astype(jnp.float32)
    rb = _pick_row_block(n, row_target)
    out = pl.pallas_call(
        _edge_embed_kernel,
        out_shape=jax.ShapeDtypeStruct((n, H), jnp.bfloat16),
        grid=(n // rb,),
        in_specs=[
            pl.BlockSpec((rb, 1), lambda i: (i, 0)),
            pl.BlockSpec((1, H), lambda i: (0, 0)),
            pl.BlockSpec((H, H), lambda i: (0, 0)),
            pl.BlockSpec((1, H), lambda i: (0, 0)),
        ],
        out_specs=pl.BlockSpec((rb, H), lambda i: (i, 0)),
        compiler_params=pltpu.CompilerParams(
            dimension_semantics=("parallel",),
            vmem_limit_bytes=int(vmem_limit)),
    )(g, inv_dim_t, w_bf16, b)
    return out.reshape(B, V, V, H)


# -----------------------------------------------------------------------------
# Fallback path kernel B: row-tiled GNN layer, grid=(B, V//tv)
# -----------------------------------------------------------------------------
def _gnn_layer_tiled_kernel(xf_ref, xr_ref, e_ref, wn_ref, bn_ref, wc_ref,
                            bc_ref, wo_ref, bo_ref, ln_ref, xo_ref, eo_ref):
    h_full = xf_ref[0]            # (V, H)  f32
    h_rows = xr_ref[0]            # (tv, H) f32
    e_rows = e_ref[0]             # (tv, V, H) bf16
    V, H = h_full.shape
    R = h_rows.shape[0]
    wn = wn_ref[...]
    bn = bn_ref[...]
    ln = ln_ref[...]

    va = jnp.dot(h_full.astype(jnp.bfloat16), wn[:, :2 * H],
                 preferred_element_type=jnp.float32) + bn[:, :2 * H]
    Vh, Ah = va[:, :H], va[:, H:]
    ub = jnp.dot(h_rows.astype(jnp.bfloat16), wn[:, 2 * H:],
                 preferred_element_type=jnp.float32) + bn[:, 2 * H:]
    Uh, Bh = ub[:, :H], ub[:, H:]

    Ce = (jnp.dot(e_rows.reshape(R * V, H), wc_ref[...],
                  preferred_element_type=jnp.float32) + bc_ref[...]).reshape(R, V, H)
    e_new = Ah[None, :, :] + Bh[:, None, :] + Ce
    gates = jax.nn.sigmoid(e_new)
    agg = jnp.sum(gates * Vh[None, :, :], axis=1)

    h_new = jnp.maximum(_layernorm(Uh + agg, ln[0], ln[1]), 0.0)
    xo_ref[0] = h_rows + h_new

    e2 = jnp.maximum(_layernorm(e_new.reshape(R * V, H), ln[2], ln[3]), 0.0)
    t = _layernorm(e2, ln[4], ln[5])
    t = t * jax.nn.sigmoid(t)
    t = jnp.dot(t.astype(jnp.bfloat16), wo_ref[...],
                preferred_element_type=jnp.float32) + bo_ref[...]
    e_out = e_rows.reshape(R * V, H).astype(jnp.float32) + t
    eo_ref[0] = e_out.reshape(R, V, H).astype(jnp.bfloat16)


def gnn_layer_tiled_pallas(x, e, layer, *, tv, vmem_limit):
    B, V, H = x.shape
    assert V % tv == 0 and (tv == V or tv % 8 == 0)
    return pl.pallas_call(
        _gnn_layer_tiled_kernel,
        out_shape=(
            jax.ShapeDtypeStruct((B, V, H), jnp.float32),
            jax.ShapeDtypeStruct((B, V, V, H), jnp.bfloat16),
        ),
        grid=(B, V // tv),
        in_specs=[
            pl.BlockSpec((1, V, H), lambda b, t: (b, 0, 0)),
            pl.BlockSpec((1, tv, H), lambda b, t: (b, t, 0)),
            pl.BlockSpec((1, tv, V, H), lambda b, t: (b, t, 0, 0)),
            pl.BlockSpec((H, 4 * H), lambda b, t: (0, 0)),
            pl.BlockSpec((1, 4 * H), lambda b, t: (0, 0)),
            pl.BlockSpec((H, H), lambda b, t: (0, 0)),
            pl.BlockSpec((1, H), lambda b, t: (0, 0)),
            pl.BlockSpec((H, H), lambda b, t: (0, 0)),
            pl.BlockSpec((1, H), lambda b, t: (0, 0)),
            pl.BlockSpec((6, 1, H), lambda b, t: (0, 0, 0)),
        ],
        out_specs=(
            pl.BlockSpec((1, tv, H), lambda b, t: (b, t, 0)),
            pl.BlockSpec((1, tv, V, H), lambda b, t: (b, t, 0, 0)),
        ),
        compiler_params=pltpu.CompilerParams(
            dimension_semantics=("parallel", "parallel"),
            vmem_limit_bytes=int(vmem_limit)),
    )(x, x, e, layer["wn"], layer["bn"], layer["wc"], layer["bc"],
      layer["wo"], layer["bo"], layer["ln"])


# -----------------------------------------------------------------------------
# Fallback path kernel C: tiled two-pass output head.
# grid=(B, 2*NT): pass 1 (t <  NT) accumulates GroupNorm stats over row tiles,
#                 pass 2 (t >= NT) normalizes + ReLU + 1x1 conv per row tile.
# -----------------------------------------------------------------------------
def _out_head_tiled_kernel(e_ref, g_ref, bt_ref, w_ref, b_ref, o_ref,
                           s_ref, ss_ref, sc_ref, *, groups, nt):
    t = pl.program_id(1)
    _, tv, V, H = e_ref.shape
    gs = H // groups
    n_per_group = float(V * V * gs)

    @pl.when(t == 0)
    def _():
        s_ref[...] = jnp.zeros_like(s_ref)
        ss_ref[...] = jnp.zeros_like(ss_ref)

    @pl.when(t < nt)
    def _():
        x = e_ref[0].reshape(tv * V, H).astype(jnp.float32)
        s_ref[...] = s_ref[...] + jnp.sum(x, axis=0, keepdims=True)
        ss_ref[...] = ss_ref[...] + jnp.sum(x * x, axis=0, keepdims=True)

    @pl.when(t == nt)
    def _():
        ci = jax.lax.broadcasted_iota(jnp.int32, (H, H), 0) // gs
        cj = jax.lax.broadcasted_iota(jnp.int32, (H, H), 1) // gs
        gmask = (ci == cj).astype(jnp.float32)
        mean = jnp.dot(s_ref[...], gmask,
                       preferred_element_type=jnp.float32) / n_per_group
        ex2 = jnp.dot(ss_ref[...], gmask,
                      preferred_element_type=jnp.float32) / n_per_group
        var = jnp.maximum(ex2 - mean * mean, 0.0)
        scale = g_ref[...] * jax.lax.rsqrt(var + 1e-5)
        sc_ref[0] = scale
        sc_ref[1] = bt_ref[...] - mean * scale

    @pl.when(t >= nt)
    def _():
        x = e_ref[0].reshape(tv * V, H).astype(jnp.float32)
        xn = jnp.maximum(x * sc_ref[0] + sc_ref[1], 0.0)
        y = jax.lax.dot_general(
            w_ref[...], xn.astype(jnp.bfloat16),
            dimension_numbers=(((1,), (1,)), ((), ())),
            preferred_element_type=jnp.float32)            # (C, tv*V) lane-dense
        o_ref[0, 0] = y + b_ref[...]


def out_head_tiled_pallas(e, gn_gamma, gn_beta, conv_w_t, conv_b, *, groups,
                          vmem_limit, head_tile=None):
    B, V, _, H = e.shape
    C = conv_w_t.shape[0]
    tv = head_tile if head_tile is not None else _pick_head_tile(V, H, C, vmem_limit)
    assert V % tv == 0 and (tv == V or tv % 8 == 0)
    nt = V // tv
    kernel = functools.partial(_out_head_tiled_kernel, groups=groups, nt=nt)
    out = pl.pallas_call(
        kernel,
        out_shape=jax.ShapeDtypeStruct((B, nt, C, tv * V), jnp.float32),
        grid=(B, 2 * nt),
        in_specs=[
            pl.BlockSpec((1, tv, V, H),
                         lambda b, t: (b, jnp.where(t < nt, t, t - nt), 0, 0)),
            pl.BlockSpec((1, H), lambda b, t: (0, 0)),
            pl.BlockSpec((1, H), lambda b, t: (0, 0)),
            pl.BlockSpec((C, H), lambda b, t: (0, 0)),
            pl.BlockSpec((C, 1), lambda b, t: (0, 0)),
        ],
        out_specs=pl.BlockSpec((1, 1, C, tv * V),
                               lambda b, t: (b, jnp.where(t < nt, 0, t - nt), 0, 0)),
        scratch_shapes=[
            pltpu.VMEM((1, H), jnp.float32),       # sum
            pltpu.VMEM((1, H), jnp.float32),       # sum of squares
            pltpu.VMEM((2, 1, H), jnp.float32),    # per-channel scale / shift
        ],
        compiler_params=pltpu.CompilerParams(
            dimension_semantics=("parallel", "arbitrary"),
            vmem_limit_bytes=int(vmem_limit)),
    )(e, gn_gamma, gn_beta, conv_w_t, conv_b)
    return (out.reshape(B, nt, C, tv, V)
               .transpose(0, 2, 1, 3, 4)
               .reshape(B, C, V, V))


# -----------------------------------------------------------------------------
# Sinusoidal node position embedding (tiny; plain JAX glue, feeds pallas_linear)
# -----------------------------------------------------------------------------
def position_embedding_sine(coords, num_pos_feats, temperature=10000.0,
                            scale=2.0 * math.pi):
    B, V, _ = coords.shape
    y_embed = coords[:, :, 0] * scale
    x_embed = coords[:, :, 1] * scale
    dim_t = jnp.arange(num_pos_feats, dtype=jnp.float32)
    dim_t = temperature ** (2.0 * jnp.floor(dim_t / 2.0) / num_pos_feats)
    pos_x = x_embed[:, :, None] / dim_t
    pos_y = y_embed[:, :, None] / dim_t
    pos_x = jnp.stack(
        [jnp.sin(pos_x[:, :, 0::2]), jnp.cos(pos_x[:, :, 1::2])], axis=3
    ).reshape(B, V, num_pos_feats)
    pos_y = jnp.stack(
        [jnp.sin(pos_y[:, :, 0::2]), jnp.cos(pos_y[:, :, 1::2])], axis=3
    ).reshape(B, V, num_pos_feats)
    return jnp.concatenate([pos_y, pos_x], axis=2)       # (B, V, 2*num_pos_feats)


# -----------------------------------------------------------------------------
# Parameter init (deterministic; matches module __init__ shapes / zero_module)
# -----------------------------------------------------------------------------
def init_params(key, num_layers, hidden_dim, output_channels, groups=32,
                temperature=10000.0):
    H = hidden_dim
    assert H % groups == 0
    sc = 1.0 / math.sqrt(H)

    def unif(k, shape):
        return jax.random.uniform(k, shape, jnp.float32, minval=-sc, maxval=sc)

    keys = jax.random.split(key, 8 + num_layers)
    p = {"hidden_dim": H, "groups": groups}

    c = jnp.arange(H, dtype=jnp.float32)
    dim_t = temperature ** (2.0 * jnp.floor(c / 2.0) / H)
    p["inv_dim_t"] = (1.0 / dim_t).reshape(1, H)

    p["node_embed_w"] = unif(keys[0], (H, H))
    p["node_embed_b"] = unif(keys[1], (1, H))
    p["edge_embed_w"] = unif(keys[2], (H, H)).astype(jnp.bfloat16)
    p["edge_embed_b"] = unif(keys[3], (1, H))

    wn, bn, wc, bc, wo, bo, ln = [], [], [], [], [], [], []
    for l in range(num_layers):
        lk = jax.random.split(keys[8 + l], 10)
        # fused node weight columns: [V | A | U | B]  (PyTorch W.T per sub-linear)
        wn.append(jnp.concatenate([unif(lk[i], (H, H)) for i in range(4)],
                                  axis=1).astype(jnp.bfloat16))
        bn.append(jnp.concatenate([unif(lk[4 + i], (1, H)) for i in range(4)],
                                  axis=1))
        wc.append(unif(lk[8], (H, H)).astype(jnp.bfloat16))
        bc.append(unif(lk[9], (1, H)))
        wo.append(jnp.zeros((H, H), jnp.bfloat16))         # zero_module Linear
        bo.append(jnp.zeros((1, H), jnp.float32))
        ln.append(jnp.stack([jnp.ones((1, H), jnp.float32),
                             jnp.zeros((1, H), jnp.float32)] * 3, axis=0))
    p["layers"] = {
        "wn": jnp.stack(wn), "bn": jnp.stack(bn),
        "wc": jnp.stack(wc), "bc": jnp.stack(bc),
        "wo": jnp.stack(wo), "bo": jnp.stack(bo),
        "ln": jnp.stack(ln),
    }

    p["gn_gamma"] = jnp.ones((1, H), jnp.float32)
    p["gn_beta"] = jnp.zeros((1, H), jnp.float32)
    p["out_w_t"] = unif(keys[4], (output_channels, H)).astype(jnp.bfloat16)
    p["out_b"] = unif(keys[5], (output_channels, 1))
    return p


# -----------------------------------------------------------------------------
# Full dense forward (equivalent to GNNEncoder.dense_forward)
# -----------------------------------------------------------------------------
def gnn_encoder_forward(params, coords, graph, *, force_tiled=False,
                        edge_tile=None, head_tile=None):
    B, V, _ = coords.shape
    H = params["hidden_dim"]
    budget = _vmem_budget()

    # node path: sine pos embedding (tiny) -> node_embed linear (f32)
    pos = position_embedding_sine(coords, H // 2)                    # (B, V, H)
    x = pallas_linear(pos.reshape(B * V, H), params["node_embed_w"],
                      params["node_embed_b"]).reshape(B, V, H)

    stacks = params["layers"]
    L = int(stacks["wn"].shape[0])
    C = int(params["out_w_t"].shape[0])

    fits, chunk = _fused_fits(V, H, C, budget)
    if fits and not force_tiled:
        # main path: edge embed + all layers + output head in one kernel;
        # the (V,V,H) edge tensor never leaves VMEM.
        return gnn_encoder_fused_pallas(x, graph, params,
                                        chunk=chunk, vmem_limit=budget)

    # fallback path for problems too large for a VMEM-resident edge slab
    e = edge_embed_pallas(graph, params["inv_dim_t"], params["edge_embed_w"],
                          params["edge_embed_b"], vmem_limit=budget)
    tv = edge_tile if edge_tile is not None else _pick_edge_tile(V, H, budget)
    for l in range(L):
        layer = {k: v[l] for k, v in stacks.items()}
        x, e = gnn_layer_tiled_pallas(x, e, layer, tv=tv, vmem_limit=budget)
    return out_head_tiled_pallas(e, params["gn_gamma"], params["gn_beta"],
                                 params["out_w_t"], params["out_b"],
                                 groups=params["groups"], vmem_limit=budget,
                                 head_tile=head_tile)


if __name__ == "__main__":
    B, V, H, NUM_LAYERS, OUT_C = 2, 16, 64, 3, 2   # H must be a multiple of 32

    key = jax.random.PRNGKey(0)
    k1, k2, k3 = jax.random.split(key, 3)
    coords = jax.random.uniform(k1, (B, V, 2), jnp.float32)
    graph = (jax.random.uniform(k2, (B, V, V)) < 0.5).astype(jnp.float32)

    params = init_params(k3, NUM_LAYERS, H, OUT_C)

    # main path: fully fused kernel (embed + layers + head; e stays in VMEM)
    out = gnn_encoder_forward(params, coords, graph)
    out = jax.block_until_ready(out)
    assert out.shape == (B, OUT_C, V, V), out.shape
    assert bool(jnp.all(jnp.isfinite(out)))

    # also exercise the row-tiled fallback path (per-layer kernels + tiled
    # two-pass output head) and check consistency against the fused path
    out_tiled = gnn_encoder_forward(params, coords, graph, force_tiled=True,
                                    edge_tile=8, head_tile=8)
    out_tiled = jax.block_until_ready(out_tiled)
    assert out_tiled.shape == (B, OUT_C, V, V)
    assert bool(jnp.allclose(out, out_tiled, atol=5e-2, rtol=5e-2))

    print("KERNEL_OK")
</pallas_src>

<mosaic_0001>
module attributes {stable_mosaic.version = 11 : i64} {
  func.func @_linear_kernel(%arg0: i32, %arg1: memref<32x64xf32, #tpu.memory_space<vmem>>, %arg2: memref<64x64xf32, #tpu.memory_space<vmem>>, %arg3: memref<1x64xf32, #tpu.memory_space<vmem>>, %arg4: memref<32x64xf32, #tpu.memory_space<vmem>>) attributes {dimension_semantics = [#tpu.dimension_semantics<parallel>], iteration_bounds = array<i64: 1>, scalar_prefetch = 0 : i64, scratch_operands = 0 : i64, tpu.core_type = #tpu.core_type<tc>, window_params = [{pipeline_mode = #tpu.pipeline_mode<synchronous>, transform_indices = @transform_0, window_bounds = array<i64: 32, 64>}, {pipeline_mode = #tpu.pipeline_mode<synchronous>, transform_indices = @transform_1, window_bounds = array<i64: 64, 64>}, {pipeline_mode = #tpu.pipeline_mode<synchronous>, transform_indices = @transform_2, window_bounds = array<i64: 1, 64>}, {pipeline_mode = #tpu.pipeline_mode<synchronous>, transform_indices = @transform_3, window_bounds = array<i64: 32, 64>}]} {
    %c0 = arith.constant 0 : index
    %c0_0 = arith.constant 0 : index
    %0 = vector.load %arg1[%c0, %c0_0] : memref<32x64xf32, #tpu.memory_space<vmem>>, vector<32x64xf32>
    %c0_1 = arith.constant 0 : index
    %c0_2 = arith.constant 0 : index
    %1 = vector.load %arg2[%c0_1, %c0_2] : memref<64x64xf32, #tpu.memory_space<vmem>>, vector<64x64xf32>
    %cst = arith.constant dense<0.000000e+00> : vector<32x64xf32>
    %2 = tpu.matmul %0, %1, %cst {dimension_numbers = #tpu.dot_dimension_numbers<[1], [0], [0], [1], [0, 0, 1, 1], [], []>} : vector<32x64xf32>, vector<64x64xf32>, vector<32x64xf32> -> vector<32x64xf32>
    %c0_3 = arith.constant 0 : index
    %c0_4 = arith.constant 0 : index
    %3 = vector.load %arg3[%c0_3, %c0_4] : memref<1x64xf32, #tpu.memory_space<vmem>>, vector<1x64xf32>
    %4 = vector.broadcast %3 : vector<1x64xf32> to vector<32x64xf32>
    %5 = arith.addf %2, %4 : vector<32x64xf32>
    %c0_5 = arith.constant 0 : index
    %c0_6 = arith.constant 0 : index
    %6 = vector.load %arg4[%c0_5, %c0_6] : memref<32x64xf32, #tpu.memory_space<vmem>>, vector<32x64xf32>
    tpu.vector_store %arg4[%c0_5, %c0_6], %5 {strides = array<i32>} : memref<32x64xf32, #tpu.memory_space<vmem>>, vector<32x64xf32>,
    return
  }
  func.func @transform_0(%arg0: i32) -> (i32, i32) {
    %c0_i32 = arith.constant 0 : i32
    %c0_i32_0 = arith.constant 0 : i32
    %c0_i32_1 = arith.constant 0 : i32
    return %c0_i32, %c0_i32_0 : i32, i32
  }
  func.func @transform_1(%arg0: i32) -> (i32, i32) {
    %c0_i32 = arith.constant 0 : i32
    %c0_i32_0 = arith.constant 0 : i32
    %c0_i32_1 = arith.constant 0 : i32
    return %c0_i32, %c0_i32_0 : i32, i32
  }
  func.func @transform_2(%arg0: i32) -> (i32, i32) {
    %c0_i32 = arith.constant 0 : i32
    %c0_i32_0 = arith.constant 0 : i32
    %c0_i32_1 = arith.constant 0 : i32
    return %c0_i32, %c0_i32_0 : i32, i32
  }
  func.func @transform_3(%arg0: i32) -> (i32, i32) {
    %c0_i32 = arith.constant 0 : i32
    %c0_i32_0 = arith.constant 0 : i32
    %c0_i32_1 = arith.constant 0 : i32
    return %c0_i32, %c0_i32_0 : i32, i32
  }
}

</mosaic_0001>

<llo_original>
// kernel: tpu_custom_call.1
$region0: #{tpu_custom_call.1}
  #allocation0 [shape = 'u32[]', space=smem, size = 0x4, offset = 0x4, fixed_abs, tag = 'smem constant byte address 0x4 - core index']
  #allocation1 [shape = 'u32[144,128]{1,0:T(1,128)}', space=vmem, size = 0x12000, scoped, tag = 'internal scratch']
  %s0 = inlined_call_operand.hbm [shape: f32[32,64], index: 0, kind: input, shape index: {}]
  %s1 = inlined_call_operand.hbm [shape: f32[64,64], index: 1, kind: input, shape index: {}]
  %s2 = inlined_call_operand.vmem [shape: f32[1,64], index: 2, kind: input, shape index: {}]
  %s3 = inlined_call_operand.hbm [shape: f32[32,64], index: 3, kind: output, shape index: {}]
  %s4 = sld [smem:[#allocation0]]
  $region30: #{tpu_custom_call.1} parent=0
    _
  %s6 = ssub.s32 1, %s4
  %s7 = scalar_select 0, %s6, %s4
  $region1: #{tpu_custom_call.1} parent=0
    #allocation2 [shape = 'u8[16384]{0}', space=vmem, size = 0x4000, scoped, tag = 'input window, operand 0, single buffered']
    #allocation3 [shape = 's32[1]{0}', space=sflag, size = 0x4, scoped, tag = 'scoped memory for tpu_custom_call.1']
    #allocation4 [shape = 's32[1]{0}', space=sflag, size = 0x4, scoped, tag = 'scoped memory for tpu_custom_call.1']
    #allocation5 [shape = 'u8[32768]{0}', space=vmem, size = 0x8000, scoped, tag = 'input window, operand 1, single buffered']
    #allocation6 [shape = 's32[1]{0}', space=sflag, size = 0x4, scoped, tag = 'scoped memory for tpu_custom_call.1']
    #allocation7 [shape = 'u8[16384]{0}', space=vmem, size = 0x4000, scoped, tag = 'output window, operand 0, single buffered']
    %8 = vsyncpa [#allocation3], 0
    %9 = vsyncpa [#allocation6], 0
    %10 = vsyncpa [#allocation4], 0
    // Predicated region
    $region2: #{tpu_custom_call.1} parent=1 // pred_check
      _
    $region3: #{tpu_custom_call.1} parent=1 // pred_check_branch
      %12 = sbr.rel (0) target = $region5
    $region4: #{tpu_custom_call.1} parent=1 // pred_region
      %s14 = ssub.s32 512, 512
      %15 = vsyncadd [#allocation3], %s14
      %s16 = sshll.u32 [#allocation2], 4
      %s17 = int_to_ptr.vmem [resolvable:$true] %s16
      %22 = dma.hbm_to_vmem [thread:$0]  %s0, 512, %s17, [#allocation3], 128, 128, 8
    $region5: #{tpu_custom_call.1} parent=1 // pred_fallthru
      _
    // Predicated region
    $region6: #{tpu_custom_call.1} parent=1 // pred_check
      _
    $region7: #{tpu_custom_call.1} parent=1 // pred_check_branch
      %24 = sbr.rel (0) target = $region9
    $region8: #{tpu_custom_call.1} parent=1 // pred_region
      %s26 = ssub.s32 1024, 1024
      %27 = vsyncadd [#allocation6], %s26
      %s28 = sshll.u32 [#allocation5], 4
      %s29 = int_to_ptr.vmem [resolvable:$true] %s28
      %34 = dma.hbm_to_vmem [thread:$0]  %s1, 1024, %s29, [#allocation6], 128, 128, 8
    $region9: #{tpu_custom_call.1} parent=1 // pred_fallthru
      _
    // Predicated region
    $region10: #{tpu_custom_call.1} parent=1 // pred_check
      _
    $region11: #{tpu_custom_call.1} parent=1 // pred_check_branch
      %36 = sbr.rel (0) target = $region13
    $region12: #{tpu_custom_call.1} parent=1 // pred_region
      _
    $region13: #{tpu_custom_call.1} parent=1 // pred_fallthru
      _
    // Predicated region
    $region14: #{tpu_custom_call.1} parent=1 // pred_check
      _
    $region15: #{tpu_custom_call.1} parent=1 // pred_check_branch
      %38 = sbr.rel (0) target = $region17
    $region16: #{tpu_custom_call.1} parent=1 // pred_region
      %39 = dma.done [#allocation3], 512
    $region17: #{tpu_custom_call.1} parent=1 // pred_fallthru
      _
    // Predicated region
    $region18: #{tpu_custom_call.1} parent=1 // pred_check
      _
    $region19: #{tpu_custom_call.1} parent=1 // pred_check_branch
      %41 = sbr.rel (0) target = $region21
    $region20: #{tpu_custom_call.1} parent=1 // pred_region
      %42 = dma.done [#allocation6], 1024
    $region21: #{tpu_custom_call.1} parent=1 // pred_fallthru
      _
    %v43 = vld [vmem:[#allocation2] sm:$0xff]
    %v44 = vld [vmem:[#allocation2 + $0x8] sm:$0xff]
    %v45 = vld [vmem:[#allocation2 + $0x10] sm:$0xff]
    %v46 = vld [vmem:[#allocation2 + $0x18] sm:$0xff]
    %v47 = vld [vmem:[#allocation5] sm:$0xff]
    %v48 = vld [vmem:[#allocation5 + $0x8] sm:$0xff]
    %v49 = vld [vmem:[#allocation5 + $0x10] sm:$0xff]
    %v50 = vld [vmem:[#allocation5 + $0x18] sm:$0xff]
    %v51 = vld [vmem:[#allocation5 + $0x20] sm:$0xff]
    %v52 = vld [vmem:[#allocation5 + $0x28] sm:$0xff]
    %v53 = vld [vmem:[#allocation5 + $0x30] sm:$0xff]
    %v54 = vld [vmem:[#allocation5 + $0x38] sm:$0xff]
    %v55 = vld [vmem:[%s2] sm:$0x1]
    %v57 = vlaneseq
    %v58 = vshrl.u32 %v57, 7
    %v59 = vsub.s32 0, %v58
    %v60 = vrot.slane %v55, %v59
    %vm62 = vcmask 523264
    %v64 = vsel %vm62, %v43, 0
    %v67 = vsel %vm62, %v44, 0
    %v70 = vsel %vm62, %v45, 0
    %v73 = vsel %vm62, %v46, 0
    %75 = vmatprep.subr.mxu0 0.0
    %76 = vmatpush1.msra.mxu0 %v47
    %77 = vmatprep.subr.mxu0 0.0
    %78 = vmatpush1.msra.mxu0 %v48
    %79 = vmatprep.subr.mxu0 0.0
    %80 = vmatpush1.msra.mxu0 %v49
    %81 = vmatprep.subr.mxu0 0.0
    %82 = vmatpush1.msra.mxu0 %v50
    %83 = vmatprep.subr.mxu0 0.0
    %84 = vmatpush1.msra.mxu0 %v51
    %85 = vmatprep.subr.mxu0 0.0
    %86 = vmatpush1.msra.mxu0 %v52
    %87 = vmatprep.subr.mxu0 0.0
    %88 = vmatpush1.msra.mxu0 %v53
    %89 = vmatprep.subr.mxu0 0.0
    %90 = vmatpush1.msra.mxu0 %v54
    %91 = vmatprep.subr.mxu0 0.0
    %92 = vmatpush1.msra.mxu0 0.0
    %93 = vmatprep.subr.mxu0 0.0
    %94 = vmatpush1.msra.mxu0 0.0
    %95 = vmatprep.subr.mxu0 0.0
    %96 = vmatpush1.msra.mxu0 0.0
    %97 = vmatprep.subr.mxu0 0.0
    %98 = vmatpush1.msra.mxu0 0.0
    %99 = vmatprep.subr.mxu0 0.0
    %100 = vmatpush1.msra.mxu0 0.0
    %101 = vmatprep.subr.mxu0 0.0
    %102 = vmatpush1.msra.mxu0 0.0
    %103 = vmatprep.subr.mxu0 0.0
    %104 = vmatpush1.msra.mxu0 0.0
    %105 = vmatprep.subr.mxu0 0.0
    %106 = vmatpush1.msra.mxu0 0.0
    %107 = vmatprep.subr.mxu0 0.0
    %108 = vmatpush1.msra.mxu0 0.0
    %109 = vmatprep.subr.mxu0 0.0
    %110 = vmatpush1.msra.mxu0 0.0
    %111 = vmatprep.subr.mxu0 0.0
    %112 = vmatpush1.msra.mxu0 0.0
    %113 = vmatprep.subr.mxu0 0.0
    %114 = vmatpush1.msra.mxu0 0.0
    %115 = vmatprep.subr.mxu0 0.0
    %116 = vmatpush1.msra.mxu0 0.0
    %117 = vmatprep.subr.mxu0 0.0
    %118 = vmatpush1.msra.mxu0 0.0
    %119 = vmatprep.subr.mxu0 0.0
    %120 = vmatpush1.msra.mxu0 0.0
    %121 = vmatprep.subr.mxu0 0.0
    %122 = vmatpush1.msra.mxu0 0.0
    %123 = vmatprep.subr.mxu0 0.0
    %124 = vmatpush1.msra.mxu0 0.0
    %125 = vmatprep.subr.mxu0 0.0
    %126 = vmatpush1.msra.mxu0 0.0
    %127 = vmatprep.subr.mxu0 0.0
    %128 = vmatpush1.msra.mxu0 0.0
    %129 = vmatprep.subr.mxu0 0.0
    %130 = vmatpush1.msra.mxu0 0.0
    %131 = vmatprep.subr.mxu0 0.0
    %132 = vmatpush1.msra.mxu0 0.0
    %133 = vmatprep.subr.mxu0 0.0
    %134 = vmatpush1.msra.mxu0 0.0
    %135 = vmatprep.subr.mxu0 0.0
    %136 = vmatpush1.msra.mxu0 0.0
    %137 = vmatprep.subr.mxu0 0.0
    %138 = vmatpush1.msra.mxu0 0.0
    %139 = vmatprep.mubr.f32.mxu0 0.0
    %140 = vmatmul.mubr.f32.gmra.mrb[0].mxu0 %v64
    %v141 = vpop.f32.mrb[0].mxu0
    %v142 = vadd.f32 %v60, %v141
    %v143 = vpop.f32.mrb[0].mxu0
    %144 = vmatprep.mubr.f32.mxu0 0.0
    %145 = vmatmul.mubr.f32.gmra.mrb[0].mxu0 %v67
    %v146 = vpop.f32.mrb[0].mxu0
    %v147 = vadd.f32 %v60, %v146
    %v148 = vpop.f32.mrb[0].mxu0
    %149 = vmatprep.mubr.f32.mxu0 0.0
    %150 = vmatmul.mubr.f32.gmra.mrb[0].mxu0 %v70
    %v151 = vpop.f32.mrb[0].mxu0
    %v152 = vadd.f32 %v60, %v151
    %v153 = vpop.f32.mrb[0].mxu0
    %154 = vmatprep.mubr.f32.mxu0 0.0
    %155 = vmatmul.mubr.f32.gmra.mrb[0].mxu0 %v73
    %v156 = vpop.f32.mrb[0].mxu0
    %v157 = vadd.f32 %v60, %v156
    %v158 = vpop.f32.mrb[0].mxu0
    %159 = vdwg.mxu0
    %160 = vst.msk [vmem:[#allocation7] sm:$0xff] %vm62, %v142
    %161 = vst.msk [vmem:[#allocation7 + $0x8] sm:$0xff] %vm62, %v147
    %162 = vst.msk [vmem:[#allocation7 + $0x10] sm:$0xff] %vm62, %v152
    %163 = vst.msk [vmem:[#allocation7 + $0x18] sm:$0xff] %vm62, %v157
    // Predicated region
    $region22: #{tpu_custom_call.1} parent=1 // pred_check
      _
    $region23: #{tpu_custom_call.1} parent=1 // pred_check_branch
      %165 = sbr.rel (0) target = $region25
    $region24: #{tpu_custom_call.1} parent=1 // pred_region
      %s167 = ssub.s32 512, 512
      %168 = vsyncadd [#allocation4], %s167
      %s169 = sshll.u32 [#allocation7], 4
      %s170 = int_to_ptr.vmem [resolvable:$true] %s169
      %175 = dma.vmem_to_hbm [thread:$0]  %s170, 512, %s3, [#allocation4], 128, 128, 8
    $region25: #{tpu_custom_call.1} parent=1 // pred_fallthru
      _
    // Predicated region
    $region26: #{tpu_custom_call.1} parent=1 // pred_check
      _
    $region27: #{tpu_custom_call.1} parent=1 // pred_check_branch
      %177 = sbr.rel (0) target = $region29
    $region28: #{tpu_custom_call.1} parent=1 // pred_region
      %178 = dma.done [#allocation4], 512
    $region29: #{tpu_custom_call.1} parent=1 // pred_fallthru
      _
    %179 = vsyncpa [#allocation3], 1
    %180 = vsyncpa [#allocation6], 1
    %181 = vsyncpa [#allocation4], 1

</llo_original>
